<compile_context>
chip_gen: v5e
topology: v5e:2x2
jax: 0.10.0
libtpu: 0.0.40
codegen_flags: <defaults>
</compile_context>

<pallas_src>
import functools

import jax
import jax.numpy as jnp
from jax import lax
from jax.experimental import pallas as pl
from jax.experimental.pallas import tpu as pltpu

EPS = 1e-5  # nn.BatchNorm1d default eps


def _ru(v, m):
    return (v + m - 1) // m * m


def _vmem_capacity_bytes():
    try:
        info = pltpu.get_tpu_info()
        cap = int(getattr(info, "vmem_capacity_bytes", 0))
        if cap > 0:
            return cap
    except Exception:
        pass
    return 64 * 1024 * 1024  # conservative: v7x per-TC VMEM


# --------------------------------------------------------------------------- #
# Fused kernel: whole batch resident, (j, k) grid, BN epilogue at k == last.   #
# --------------------------------------------------------------------------- #
def _fused_kernel(x_ref, w_ref, p_ref, o_ref, *scratch,
                  n_real, add_batch_norm, x_resident, tk, mm_dtype):
    acc_ref = scratch[0] if scratch else o_ref          # accumulate into o_ref if f32
    k = pl.program_id(1)

    @pl.when(k == 0)
    def _():
        acc_ref[...] = jnp.zeros_like(acc_ref)

    if x_resident:
        start = pl.multiple_of(k * tk, 128)
        x_blk = x_ref[:, pl.ds(start, tk)]               # x DMA'd to VMEM once, sliced
    else:
        x_blk = x_ref[...]
    w_blk = w_ref[...]
    if mm_dtype is not None:
        x_blk = x_blk.astype(mm_dtype)
        w_blk = w_blk.astype(mm_dtype)
    acc_ref[...] += jnp.dot(x_blk, w_blk, preferred_element_type=jnp.float32)

    @pl.when(k == pl.num_programs(1) - 1)
    def _():
        acc = acc_ref[...]                               # (pad_n, tn) f32; pad rows = 0
        if add_batch_norm:
            inv_n = jnp.float32(1.0 / n_real)
            mean = jnp.sum(acc, axis=0, keepdims=True) * inv_n
            centered = acc - mean
            if acc.shape[0] > n_real:                    # mask padded batch rows
                rows = lax.broadcasted_iota(jnp.int32, acc.shape, 0)
                centered = jnp.where(rows < n_real, centered, 0.0)
            var = jnp.sum(centered * centered, axis=0, keepdims=True) * inv_n
            # Linear bias shifts y and its batch mean identically -> cancels in BN.
            scale = p_ref[0:1, :] * lax.rsqrt(var + EPS)   # gamma row; rsqrt -> EUP
            shift = p_ref[1:2, :] - mean * scale           # beta row
            out = acc * scale + shift
        else:
            out = acc + p_ref[0:1, :]                       # bias row
        o_ref[...] = out.astype(o_ref.dtype)


# --------------------------------------------------------------------------- #
# Two-pass fallback (large N): pass 1 = tiled matmul emitting y + column stats #
# --------------------------------------------------------------------------- #
def _matmul_stats_kernel(x_ref, w_ref, y_ref, stats_ref, *, mm_dtype):
    k = pl.program_id(2)

    @pl.when(k == 0)
    def _():
        y_ref[...] = jnp.zeros_like(y_ref)

    x_blk = x_ref[...]
    w_blk = w_ref[...]
    if mm_dtype is not None:
        x_blk = x_blk.astype(mm_dtype)
        w_blk = w_blk.astype(mm_dtype)
    y_ref[...] += jnp.dot(x_blk, w_blk, preferred_element_type=jnp.float32)

    @pl.when(k == pl.num_programs(2) - 1)
    def _():
        acc = y_ref[...]                                  # (tm, tn) f32, pad rows = 0
        s1 = jnp.sum(acc, axis=0, keepdims=True)
        s2 = jnp.sum(acc * acc, axis=0, keepdims=True)
        pad = jnp.zeros((6, acc.shape[1]), jnp.float32)
        stats_ref[0] = jnp.concatenate([s1, s2, pad], axis=0)   # rows 0/1 = sum, sumsq


def _scale_shift_kernel(y_ref, scale_ref, shift_ref, o_ref):
    o_ref[...] = (y_ref[...] * scale_ref[...] + shift_ref[...]).astype(o_ref.dtype)


# --------------------------------------------------------------------------- #
# Wrapper                                                                      #
# --------------------------------------------------------------------------- #
def linear_unit(x, w, b, gamma, beta, *, add_batch_norm=True,
                tn=256, tk=512, out_dtype=jnp.float32,
                matmul_dtype=None, x_resident=None,
                force_two_pass=False, vmem_budget_bytes=None):
    """Fused Linear (+ optional BatchNorm1d training-mode forward) on TPU.

    x: (N, D_in); w: (D_in, D_out) (nn.Linear weight pre-transposed);
    b/gamma/beta: (D_out,).  matmul_dtype=jnp.bfloat16 feeds the MXU bf16 with f32 acc.
    """
    n, d_in = x.shape
    d_out = w.shape[1]
    xb = jnp.dtype(x.dtype).itemsize
    wb = jnp.dtype(w.dtype).itemsize
    ob = jnp.dtype(out_dtype).itemsize
    sub = 16 if x.dtype == jnp.bfloat16 else 8

    cap = _vmem_capacity_bytes()
    budget = int(vmem_budget_bytes) if vmem_budget_bytes is not None else int(cap * 0.70)
    vmem_limit = int(min(100 * 1024 * 1024, max(int(cap * 0.90), budget)))

    pad_n = _ru(n, sub)
    tn_f = min(tn, _ru(d_out, 128))
    tk_f = min(tk, _ru(d_in, 128))
    # Megacore (v7x): keep >=2 output tiles when D_out allows it.
    if _ru(d_out, 128) >= 256 and _ru(d_out, 128) // tn_f < 2:
        tn_f = 128

    sep_acc = out_dtype != jnp.float32

    def fused_bytes(tn_, tk_, resident, w_buf):
        x_cols = _ru(d_in, tk_) if resident else tk_
        total = pad_n * x_cols * xb * 2            # x (double-buffered)
        total += tk_ * tn_ * wb * w_buf            # w
        total += pad_n * tn_ * ob * 2              # out (double-buffered)
        total += pad_n * tn_ * 4 if sep_acc else 0  # acc scratch (non-f32 out only)
        total += 64 * 1024                          # params + slack
        return total

    use_fused = not force_two_pass
    if use_fused:
        while fused_bytes(tn_f, tk_f, False, 2) > budget:
            if tk_f > 128:
                tk_f = max(128, _ru(tk_f // 2, 128))
            elif tn_f > 128:
                tn_f = max(128, _ru(tn_f // 2, 128))
            else:
                use_fused = False                  # whole-batch tile cannot fit VMEM
                break

    if use_fused:
        pad_out = _ru(d_out, tn_f)
        pad_in = _ru(d_in, tk_f)
        grid_k = pad_in // tk_f
        # Tiny-batch regime: weight streaming dominates -> deepen w pipeline.
        w_buf = 3 if (pad_n <= 64 and grid_k >= 3) else 2
        if w_buf == 3 and fused_bytes(tn_f, tk_f, False, 3) > budget:
            w_buf = 2
        if x_resident is None:
            resident = fused_bytes(tn_f, tk_f, True, w_buf) <= budget
        else:
            resident = bool(x_resident)

        # Pad only when actually unaligned.
        xp = x if (pad_n == n and pad_in == d_in) else jnp.pad(
            x, ((0, pad_n - n), (0, pad_in - d_in)))
        wp = w if (pad_in == d_in and pad_out == d_out) else jnp.pad(
            w, ((0, pad_in - d_in), (0, pad_out - d_out)))
        if add_batch_norm:
            params = jnp.stack([gamma.reshape(-1).astype(jnp.float32),
                                beta.reshape(-1).astype(jnp.float32)], axis=0)
        else:
            params = b.reshape(1, -1).astype(jnp.float32)
        if pad_out != d_out:
            params = jnp.pad(params, ((0, 0), (0, pad_out - d_out)))

        if resident:
            x_spec = pl.BlockSpec((pad_n, pad_in), lambda j, k: (0, 0))
        else:
            x_spec = pl.BlockSpec((pad_n, tk_f), lambda j, k: (0, k))
        w_index = lambda j, k: (k, j)
        if w_buf > 2:
            try:
                w_spec = pl.BlockSpec((tk_f, tn_f), w_index,
                                      pipeline_mode=pl.Buffered(w_buf))
            except TypeError:
                w_spec = pl.BlockSpec((tk_f, tn_f), w_index)
        else:
            w_spec = pl.BlockSpec((tk_f, tn_f), w_index)

        kernel = functools.partial(_fused_kernel, n_real=n,
                                   add_batch_norm=add_batch_norm,
                                   x_resident=resident, tk=tk_f,
                                   mm_dtype=matmul_dtype)
        scratch_shapes = [pltpu.VMEM((pad_n, tn_f), jnp.float32)] if sep_acc else []

        out = pl.pallas_call(
            kernel,
            out_shape=jax.ShapeDtypeStruct((pad_n, pad_out), out_dtype),
            grid_spec=pltpu.PrefetchScalarGridSpec(
                num_scalar_prefetch=0,
                grid=(pad_out // tn_f, pad_in // tk_f),
                in_specs=[x_spec, w_spec,
                          pl.BlockSpec((params.shape[0], tn_f), lambda j, k: (0, j))],
                out_specs=pl.BlockSpec((pad_n, tn_f), lambda j, k: (0, j)),
                scratch_shapes=scratch_shapes),
            compiler_params=pltpu.CompilerParams(
                dimension_semantics=("parallel", "arbitrary"),
                vmem_limit_bytes=vmem_limit),
        )(xp, wp, params)
        return out[:n, :d_out]

    # ---------------- Two-pass fallback (batch-tiled) ---------------- #
    tm = min(512, _ru(n, sub))
    tn_b = min(256, _ru(d_out, 128))
    tk_b = min(256, _ru(d_in, 128))
    pad_n2 = _ru(n, tm)
    pad_out2 = _ru(d_out, tn_b)
    pad_in2 = _ru(d_in, tk_b)
    grid_i, grid_j, grid_k = pad_n2 // tm, pad_out2 // tn_b, pad_in2 // tk_b

    xp = x if (pad_n2 == n and pad_in2 == d_in) else jnp.pad(
        x, ((0, pad_n2 - n), (0, pad_in2 - d_in)))
    wp = w if (pad_in2 == d_in and pad_out2 == d_out) else jnp.pad(
        w, ((0, pad_in2 - d_in), (0, pad_out2 - d_out)))

    y, stats = pl.pallas_call(
        functools.partial(_matmul_stats_kernel, mm_dtype=matmul_dtype),
        out_shape=(jax.ShapeDtypeStruct((pad_n2, pad_out2), jnp.float32),
                   jax.ShapeDtypeStruct((grid_i, 8, pad_out2), jnp.float32)),
        grid_spec=pltpu.PrefetchScalarGridSpec(
            num_scalar_prefetch=0,
            grid=(grid_i, grid_j, grid_k),
            in_specs=[pl.BlockSpec((tm, tk_b), lambda i, j, k: (i, k)),
                      pl.BlockSpec((tk_b, tn_b), lambda i, j, k: (k, j))],
            out_specs=(pl.BlockSpec((tm, tn_b), lambda i, j, k: (i, j)),
                       pl.BlockSpec((1, 8, tn_b), lambda i, j, k: (i, 0, j)))),
        compiler_params=pltpu.CompilerParams(
            dimension_semantics=("parallel", "parallel", "arbitrary"),
            vmem_limit_bytes=vmem_limit),
    )(xp, wp)

    s1 = jnp.sum(stats[:, 0, :], axis=0)          # per-feature sum(y)   (pad_out2,)
    s2 = jnp.sum(stats[:, 1, :], axis=0)          # per-feature sum(y^2)
    if add_batch_norm:
        mean = s1 / n
        var = jnp.maximum(s2 / n - mean * mean, 0.0)
        gam = gamma.reshape(-1).astype(jnp.float32)
        bet = beta.reshape(-1).astype(jnp.float32)
        if pad_out2 != d_out:
            gam = jnp.pad(gam, (0, pad_out2 - d_out))
            bet = jnp.pad(bet, (0, pad_out2 - d_out))
        scale = gam * lax.rsqrt(var + EPS)
        shift = bet - mean * scale
    else:
        scale = jnp.ones((pad_out2,), jnp.float32)
        bias = b.reshape(-1).astype(jnp.float32)
        shift = bias if pad_out2 == d_out else jnp.pad(bias, (0, pad_out2 - d_out))
    scale2 = scale.reshape(1, -1)
    shift2 = shift.reshape(1, -1)

    out = pl.pallas_call(
        _scale_shift_kernel,
        out_shape=jax.ShapeDtypeStruct((pad_n2, pad_out2), out_dtype),
        grid_spec=pltpu.PrefetchScalarGridSpec(
            num_scalar_prefetch=0,
            grid=(grid_i, grid_j),
            in_specs=[pl.BlockSpec((tm, tn_b), lambda i, j: (i, j)),
                      pl.BlockSpec((1, tn_b), lambda i, j: (0, j)),
                      pl.BlockSpec((1, tn_b), lambda i, j: (0, j))],
            out_specs=pl.BlockSpec((tm, tn_b), lambda i, j: (i, j))),
        compiler_params=pltpu.CompilerParams(
            dimension_semantics=("parallel", "parallel"),
            vmem_limit_bytes=vmem_limit),
    )(y, scale2, shift2)
    return out[:n, :d_out]


if __name__ == "__main__":
    def reference(x, w, b, gamma, beta, add_bn=True):
        y = x.astype(jnp.float32) @ w.astype(jnp.float32) + b
        if not add_bn:
            return y
        m = y.mean(axis=0, keepdims=True)
        v = ((y - m) ** 2).mean(axis=0, keepdims=True)
        return gamma * (y - m) / jnp.sqrt(v + EPS) + beta

    key = jax.random.PRNGKey(0)

    # --- Case 1: aligned shapes, f32, (2,2) tiled fused grid, resident x ----
    N, D_IN, D_OUT = 8, 512, 512
    kx, kw, kb = jax.random.split(key, 3)
    x = jax.random.normal(kx, (N, D_IN), dtype=jnp.float32)
    bound = 1.0 / (D_IN ** 0.5)
    w = jax.random.uniform(kw, (D_IN, D_OUT), minval=-bound, maxval=bound,
                           dtype=jnp.float32)
    b = jax.random.uniform(kb, (D_OUT,), minval=-bound, maxval=bound,
                           dtype=jnp.float32)
    gamma = jnp.ones((D_OUT,), jnp.float32)
    beta = jnp.zeros((D_OUT,), jnp.float32)
    ref = reference(x, w, b, gamma, beta)

    out = linear_unit(x, w, b, gamma, beta, tn=256, tk=256)
    jax.block_until_ready(out)
    assert out.shape == (N, D_OUT)
    assert jnp.allclose(out, ref, atol=2e-3, rtol=2e-3), \
        float(jnp.max(jnp.abs(out - ref)))

    # --- Case 1b: same, but force the streamed-x fused path ------------------
    out_s = linear_unit(x, w, b, gamma, beta, tn=256, tk=256, x_resident=False)
    jax.block_until_ready(out_s)
    assert jnp.allclose(out_s, ref, atol=2e-3, rtol=2e-3)

    # --- Case 2: add_batch_norm=False branch ---------------------------------
    out_nobn = linear_unit(x, w, b, gamma, beta, add_batch_norm=False)
    jax.block_until_ready(out_nobn)
    ref_nobn = reference(x, w, b, gamma, beta, add_bn=False)
    assert jnp.allclose(out_nobn, ref_nobn, atol=2e-3, rtol=2e-3)

    # --- Case 3: unaligned small shapes (padding path) -----------------------
    N2, D_IN2, D_OUT2 = 8, 32, 64
    x2 = jax.random.normal(jax.random.PRNGKey(1), (N2, D_IN2), jnp.float32)
    w2 = jax.random.uniform(jax.random.PRNGKey(2), (D_IN2, D_OUT2),
                            minval=-0.2, maxval=0.2, dtype=jnp.float32)
    b2 = jnp.zeros((D_OUT2,), jnp.float32)
    g2 = jnp.full((D_OUT2,), 1.5, jnp.float32)
    be2 = jnp.full((D_OUT2,), -0.25, jnp.float32)
    out2 = linear_unit(x2, w2, b2, g2, be2)
    jax.block_until_ready(out2)
    ref2 = reference(x2, w2, b2, g2, be2)
    assert jnp.allclose(out2, ref2, atol=2e-3, rtol=2e-3)

    # --- Case 4: bf16 inputs (f32 accumulation; exercises batch-row masking) -
    out_bf16 = linear_unit(x.astype(jnp.bfloat16), w.astype(jnp.bfloat16),
                           b, gamma, beta)
    jax.block_until_ready(out_bf16)
    assert jnp.allclose(out_bf16, ref, atol=5e-2, rtol=5e-2)

    # --- Case 5: f32 inputs, bf16 MXU feed (matmul_dtype) --------------------
    out_mm = linear_unit(x, w, b, gamma, beta, matmul_dtype=jnp.bfloat16)
    jax.block_until_ready(out_mm)
    assert jnp.allclose(out_mm, ref, atol=5e-2, rtol=5e-2)

    # --- Case 6: forced two-pass (large-N) fallback, BN and no-BN ------------
    N3, D_IN3, D_OUT3 = 64, 256, 384
    x3 = jax.random.normal(jax.random.PRNGKey(3), (N3, D_IN3), jnp.float32)
    w3 = jax.random.uniform(jax.random.PRNGKey(4), (D_IN3, D_OUT3),
                            minval=-0.1, maxval=0.1, dtype=jnp.float32)
    b3 = jax.random.normal(jax.random.PRNGKey(5), (D_OUT3,), jnp.float32) * 0.1
    g3 = jnp.full((D_OUT3,), 0.75, jnp.float32)
    be3 = jnp.full((D_OUT3,), 0.5, jnp.float32)
    out3 = linear_unit(x3, w3, b3, g3, be3, force_two_pass=True)
    jax.block_until_ready(out3)
    ref3 = reference(x3, w3, b3, g3, be3)
    assert jnp.allclose(out3, ref3, atol=5e-3, rtol=5e-3)
    out3n = linear_unit(x3, w3, b3, g3, be3, add_batch_norm=False,
                        force_two_pass=True)
    jax.block_until_ready(out3n)
    ref3n = reference(x3, w3, b3, g3, be3, add_bn=False)
    assert jnp.allclose(out3n, ref3n, atol=2e-3, rtol=2e-3)

    # --- Case 7: tiny batch, long K -> deeper w pipelining (Buffered(3)) -----
    N4, D_IN4, D_OUT4 = 8, 1024, 256
    x4 = jax.random.normal(jax.random.PRNGKey(6), (N4, D_IN4), jnp.float32)
    w4 = jax.random.uniform(jax.random.PRNGKey(7), (D_IN4, D_OUT4),
                            minval=-0.05, maxval=0.05, dtype=jnp.float32)
    b4 = jnp.zeros((D_OUT4,), jnp.float32)
    g4 = jnp.ones((D_OUT4,), jnp.float32)
    be4 = jnp.zeros((D_OUT4,), jnp.float32)
    out4 = linear_unit(x4, w4, b4, g4, be4, tk=256)
    jax.block_until_ready(out4)
    ref4 = reference(x4, w4, b4, g4, be4)
    assert jnp.allclose(out4, ref4, atol=2e-3, rtol=2e-3)

    print("KERNEL_OK")
</pallas_src>

<mosaic_0001>
module attributes {stable_mosaic.version = 11 : i64} {
  func.func @_fused_kernel(%arg0: i32, %arg1: i32, %arg2: memref<8x512xf32, #tpu.memory_space<vmem>>, %arg3: memref<256x256xf32, #tpu.memory_space<vmem>>, %arg4: memref<2x256xf32, #tpu.memory_space<vmem>>, %arg5: memref<8x256xf32, #tpu.memory_space<vmem>>) attributes {dimension_semantics = [#tpu.dimension_semantics<parallel>, #tpu.dimension_semantics<arbitrary>], iteration_bounds = array<i64: 2, 2>, scalar_prefetch = 0 : i64, scratch_operands = 0 : i64, tpu.core_type = #tpu.core_type<tc>, window_params = [{pipeline_mode = #tpu.pipeline_mode<synchronous>, transform_indices = @transform_0, window_bounds = array<i64: 8, 512>}, {transform_indices = @transform_1, window_bounds = array<i64: 256, 256>}, {transform_indices = @transform_2, window_bounds = array<i64: 2, 256>}, {transform_indices = @transform_3, window_bounds = array<i64: 8, 256>}]} {
    %c0_i32 = arith.constant 0 : i32
    %0 = arith.cmpi eq, %arg1, %c0_i32 : i32
    %1 = arith.extui %0 : i1 to i32
    %c0_i32_0 = arith.constant 0 : i32
    %2 = arith.cmpi ne, %1, %c0_i32_0 : i32
    scf.if %2 {
      %cst_8 = arith.constant 0.000000e+00 : f32
      %15 = vector.broadcast %cst_8 : f32 to vector<8x256xf32>
      %c0_9 = arith.constant 0 : index
      %c0_10 = arith.constant 0 : index
      %16 = vector.load %arg5[%c0_9, %c0_10] : memref<8x256xf32, #tpu.memory_space<vmem>>, vector<8x256xf32>
      tpu.vector_store %arg5[%c0_9, %c0_10], %15 {strides = array<i32>} : memref<8x256xf32, #tpu.memory_space<vmem>>, vector<8x256xf32>,
    } else {
    }
    %c256_i32 = arith.constant 256 : i32
    %3 = arith.muli %arg1, %c256_i32 : i32
    %4 = tpu.assume_multiple %3, 128 : i32
    %c0 = arith.constant 0 : index
    %5 = arith.index_cast %4 : i32 to index
    %6 = vector.load %arg2[%c0, %5] : memref<8x512xf32, #tpu.memory_space<vmem>>, vector<8x256xf32>
    %c0_1 = arith.constant 0 : index
    %c0_2 = arith.constant 0 : index
    %7 = vector.load %arg3[%c0_1, %c0_2] : memref<256x256xf32, #tpu.memory_space<vmem>>, vector<256x256xf32>
    %c0_3 = arith.constant 0 : index
    %c0_4 = arith.constant 0 : index
    %8 = vector.load %arg5[%c0_3, %c0_4] : memref<8x256xf32, #tpu.memory_space<vmem>>, vector<8x256xf32>
    %cst = arith.constant dense<0.000000e+00> : vector<8x256xf32>
    %9 = tpu.matmul %6, %7, %cst {dimension_numbers = #tpu.dot_dimension_numbers<[1], [0], [0], [1], [0, 0, 1, 1], [], []>} : vector<8x256xf32>, vector<256x256xf32>, vector<8x256xf32> -> vector<8x256xf32>
    %10 = arith.addf %8, %9 : vector<8x256xf32>
    %c0_5 = arith.constant 0 : index
    %c0_6 = arith.constant 0 : index
    %11 = vector.load %arg5[%c0_5, %c0_6] : memref<8x256xf32, #tpu.memory_space<vmem>>, vector<8x256xf32>
    tpu.vector_store %arg5[%c0_5, %c0_6], %10 {strides = array<i32>} : memref<8x256xf32, #tpu.memory_space<vmem>>, vector<8x256xf32>,
    %c1_i32 = arith.constant 1 : i32
    %12 = arith.cmpi eq, %arg1, %c1_i32 : i32
    %13 = arith.extui %12 : i1 to i32
    %c0_i32_7 = arith.constant 0 : i32
    %14 = arith.cmpi ne, %13, %c0_i32_7 : i32
    scf.if %14 {
      %c0_8 = arith.constant 0 : index
      %c0_9 = arith.constant 0 : index
      %15 = vector.load %arg5[%c0_8, %c0_9] : memref<8x256xf32, #tpu.memory_space<vmem>>, vector<8x256xf32>
      %cst_10 = arith.constant dense<0.000000e+00> : vector<256xf32>
      %16 = vector.multi_reduction <add>, %15, %cst_10 [0] : vector<8x256xf32> to vector<256xf32>
      %17 = vector.shape_cast %16 : vector<256xf32> to vector<1x256xf32>
      %cst_11 = arith.constant 1.250000e-01 : f32
      %18 = vector.broadcast %cst_11 : f32 to vector<1x256xf32>
      %19 = arith.mulf %17, %18 : vector<1x256xf32>
      %20 = vector.broadcast %19 : vector<1x256xf32> to vector<8x256xf32>
      %21 = arith.subf %15, %20 : vector<8x256xf32>
      %22 = arith.mulf %21, %21 : vector<8x256xf32>
      %cst_12 = arith.constant dense<0.000000e+00> : vector<256xf32>
      %23 = vector.multi_reduction <add>, %22, %cst_12 [0] : vector<8x256xf32> to vector<256xf32>
      %24 = vector.shape_cast %23 : vector<256xf32> to vector<1x256xf32>
      %cst_13 = arith.constant 1.250000e-01 : f32
      %25 = vector.broadcast %cst_13 : f32 to vector<1x256xf32>
      %26 = arith.mulf %24, %25 : vector<1x256xf32>
      %c0_14 = arith.constant 0 : index
      %c0_15 = arith.constant 0 : index
      %27 = vector.load %arg4[%c0_14, %c0_15] : memref<2x256xf32, #tpu.memory_space<vmem>>, vector<1x256xf32>
      %cst_16 = arith.constant 9.99999974E-6 : f32
      %28 = vector.broadcast %cst_16 : f32 to vector<1x256xf32>
      %29 = arith.addf %26, %28 : vector<1x256xf32>
      %30 = math.rsqrt %29 : vector<1x256xf32>
      %31 = arith.mulf %27, %30 : vector<1x256xf32>
      %c1 = arith.constant 1 : index
      %c0_17 = arith.constant 0 : index
      %32 = vector.load %arg4[%c1, %c0_17] : memref<2x256xf32, #tpu.memory_space<vmem>>, vector<1x256xf32>
      %33 = arith.mulf %19, %31 : vector<1x256xf32>
      %34 = arith.subf %32, %33 : vector<1x256xf32>
      %35 = vector.broadcast %31 : vector<1x256xf32> to vector<8x256xf32>
      %36 = arith.mulf %15, %35 : vector<8x256xf32>
      %37 = vector.broadcast %34 : vector<1x256xf32> to vector<8x256xf32>
      %38 = arith.addf %36, %37 : vector<8x256xf32>
      %c0_18 = arith.constant 0 : index
      %c0_19 = arith.constant 0 : index
      %39 = vector.load %arg5[%c0_18, %c0_19] : memref<8x256xf32, #tpu.memory_space<vmem>>, vector<8x256xf32>
      tpu.vector_store %arg5[%c0_18, %c0_19], %38 {strides = array<i32>} : memref<8x256xf32, #tpu.memory_space<vmem>>, vector<8x256xf32>,
    } else {
    }
    return
  }
  func.func @transform_0(%arg0: i32, %arg1: i32) -> (i32, i32) {
    %c0_i32 = arith.constant 0 : i32
    %c0_i32_0 = arith.constant 0 : i32
    %c0_i32_1 = arith.constant 0 : i32
    return %c0_i32, %c0_i32_0 : i32, i32
  }
  func.func @transform_1(%arg0: i32, %arg1: i32) -> (i32, i32) {
    %c0_i32 = arith.constant 0 : i32
    return %arg1, %arg0 : i32, i32
  }
  func.func @transform_2(%arg0: i32, %arg1: i32) -> (i32, i32) {
    %c0_i32 = arith.constant 0 : i32
    %c0_i32_0 = arith.constant 0 : i32
    return %c0_i32, %arg0 : i32, i32
  }
  func.func @transform_3(%arg0: i32, %arg1: i32) -> (i32, i32) {
    %c0_i32 = arith.constant 0 : i32
    %c0_i32_0 = arith.constant 0 : i32
    return %c0_i32, %arg0 : i32, i32
  }
}

</mosaic_0001>

<llo_original>
// kernel: tpu_custom_call.1
$region0: #{tpu_custom_call.1}
  #allocation0 [shape = 'u32[]', space=smem, size = 0x4, offset = 0x4, fixed_abs, tag = 'smem constant byte address 0x4 - core index']
  #allocation1 [shape = 'u32[72,128]{1,0:T(1,128)}', space=vmem, size = 0x9000, scoped, tag = 'internal scratch']
  %s0 = inlined_call_operand.hbm [shape: f32[8,512], index: 0, kind: input, shape index: {}]
  %s1 = inlined_call_operand.hbm [shape: f32[512,512], index: 1, kind: input, shape index: {}]
  %s2 = inlined_call_operand.hbm [shape: f32[2,512], index: 2, kind: input, shape index: {}]
  %s3 = inlined_call_operand.hbm [shape: f32[8,512], index: 3, kind: output, shape index: {}]
  %s4 = sld [smem:[#allocation0]]
  $region65: #{tpu_custom_call.1} parent=0
    _
  %s6 = ssub.s32 1, %s4
  %s7 = scalar_select 0, %s6, %s4
  $region1: #{tpu_custom_call.1} parent=0
    #allocation2 [shape = 'u8[16384]{0}', space=vmem, size = 0x4000, scoped, tag = 'input window, operand 0, single buffered']
    #allocation3 [shape = 's32[2]{0}', space=sflag, size = 0x8, scoped, tag = 'scoped memory for tpu_custom_call.1']
    #allocation4 [shape = 's32[2]{0}', space=sflag, size = 0x8, scoped, tag = 'scoped memory for tpu_custom_call.1']
    #allocation5 [shape = 'u8[524288]{0}', space=vmem, size = 0x80000, scoped, tag = 'input window, operand 1']
    #allocation6 [shape = 's32[2]{0}', space=sflag, size = 0x8, scoped, tag = 'scoped memory for tpu_custom_call.1']
    #allocation7 [shape = 'u8[4096]{0}', space=vmem, size = 0x1000, scoped, tag = 'input window, operand 2']
    #allocation8 [shape = 'u8[16384]{0}', space=vmem, size = 0x4000, scoped, tag = 'output window, operand 0']
    %8 = vsyncpa [#allocation3], 0
    %9 = vsyncpa [#allocation6], 0
    %s10 = scalar_lea.sflag [#allocation6], 1
    %11 = vsyncpa %s10, 0
    %12 = vsyncpa [#allocation4], 0
    %s13 = scalar_lea.sflag [#allocation4], 1
    %14 = vsyncpa %s13, 0
    loop: start=0, step=1, limit=6
    $region2: #{tpu_custom_call.1} parent=1 // loop_pre_header
      _
    $region3: #{tpu_custom_call.1} parent=1 // loop_header
      %s16 = sphi 0, %s20
      %p17 = scmp.ge.s32.totalorder %s16, 6
      %s23 = sphi 0, %s35
      %s24 = sphi 0, %s31
      %s25 = sphi 0, %s23
      %s26 = sphi 0, %s24
      %s27 = sphi 0, %s25
      %s28 = sphi 0, %s26
      %s36 = sphi 0, %s36
      %s38 = sphi 0, %s36
      %s39 = sphi 0, %s38
      %s53 = sphi 0, %s39
      %s61 = sphi 0, %s63
      %s64 = sphi 0, %s61
      %s65 = sphi 0, %s64
      %s81 = sphi 0, %s65
      %s87 = sphi 0, %s89
      %s90 = sphi 0, %s87
      %s91 = sphi 0, %s90
      %s107 = sphi 0, %s91
      %s113 = sphi 0, %s115
      %s116 = sphi 0, %s113
      %s117 = sphi 0, %s116
      %s133 = sphi 0, %s117
    $region4: #{tpu_custom_call.1} parent=1 // loop_header_branch
      %19 = sbr.rel (%p17) target = $region8
    $region5: #{tpu_custom_call.1} parent=1 // loop_body
      %s21 = ssub.s32 %s16, 1
      %s22 = ssub.s32 %s16, 2
      %s29 = sadd.s32 1, %s24
      %p30 = scmp.ge.s32.totalorder %s29, 2
      %s31 = scalar_select %p30, 0, %s29
      %s32 = sadd.s32 1, %s23
      %s33 = scalar_select %p30, %s32, %s23
      %p34 = scmp.ge.s32.totalorder %s33, 2
      %s35 = scalar_select %p34, 0, %s33
      %s37 = sadd.s32 %s36, 1
      %p40 = scmp.eq.s32.totalorder %s16, 3
      %p41 = scmp.ne.s32.totalorder %s36, %s38
      %p42 = scmp.eq.s32.totalorder %s16, 0
      %p43 = por %p41, %p42
      %p44 = scmp.ne.s32.totalorder %s36, %s38
      %p45 = scmp.eq.s32.totalorder %s21, 3
      %p46 = por %p44, %p45
      %p47 = scmp.ne.s32.totalorder %s38, %s39
      %p48 = scmp.eq.s32.totalorder %s21, 0
      %p49 = por %p47, %p48
      %p50 = scmp.ne.s32.totalorder %s38, %s39
      %p51 = scmp.eq.s32.totalorder %s22, 3
      %p52 = por %p50, %p51
      %p54 = scmp.ne.s32.totalorder %s39, %s53
      %p55 = scmp.eq.s32.totalorder %s22, 0
      %p56 = por %p54, %p55
      %s57 = ssub.s32 %s24, %s31
      %s58 = ssub.s32 %s23, %s35
      %s59 = sor.u32 %s57, %s58
      %p60 = scmp.eq.s32.totalorder %s59, 0
      %s62 = sadd.s32 %s61, 1
      %s63 = scalar_select %p60, %s61, %s62
      %p66 = pneg %p60
      %p67 = scmp.eq.s32.totalorder %s16, 3
      %p68 = por %p66, %p67
      %p69 = scmp.ne.s32.totalorder %s61, %s64
      %p70 = scmp.eq.s32.totalorder %s16, 0
      %p71 = por %p69, %p70
      %p72 = scmp.ne.s32.totalorder %s61, %s64
      %p73 = scmp.eq.s32.totalorder %s21, 3
      %p74 = por %p72, %p73
      %p75 = scmp.ne.s32.totalorder %s64, %s65
      %p76 = scmp.eq.s32.totalorder %s21, 0
      %p77 = por %p75, %p76
      %p78 = scmp.ne.s32.totalorder %s64, %s65
      %p79 = scmp.eq.s32.totalorder %s22, 3
      %p80 = por %p78, %p79
      %p82 = scmp.ne.s32.totalorder %s65, %s81
      %p83 = scmp.eq.s32.totalorder %s22, 0
      %p84 = por %p82, %p83
      %s85 = ssub.s32 %s23, %s35
      %p86 = scmp.eq.s32.totalorder %s85, 0
      %s88 = sadd.s32 %s87, 1
      %s89 = scalar_select %p86, %s87, %s88
      %p92 = pneg %p86
      %p93 = scmp.eq.s32.totalorder %s16, 3
      %p94 = por %p92, %p93
      %p95 = scmp.ne.s32.totalorder %s87, %s90
      %p96 = scmp.eq.s32.totalorder %s16, 0
      %p97 = por %p95, %p96
      %p98 = scmp.ne.s32.totalorder %s87, %s90
      %p99 = scmp.eq.s32.totalorder %s21, 3
      %p100 = por %p98, %p99
      %p101 = scmp.ne.s32.totalorder %s90, %s91
      %p102 = scmp.eq.s32.totalorder %s21, 0
      %p103 = por %p101, %p102
      %p104 = scmp.ne.s32.totalorder %s90, %s91
      %p105 = scmp.eq.s32.totalorder %s22, 3
      %p106 = por %p104, %p105
      %p108 = scmp.ne.s32.totalorder %s91, %s107
      %p109 = scmp.eq.s32.totalorder %s22, 0
      %p110 = por %p108, %p109
      %s111 = ssub.s32 %s23, %s35
      %p112 = scmp.eq.s32.totalorder %s111, 0
      %s114 = sadd.s32 %s113, 1
      %s115 = scalar_select %p112, %s113, %s114
      %p118 = pneg %p112
      %p119 = scmp.eq.s32.totalorder %s16, 3
      %p120 = por %p118, %p119
      %p121 = scmp.ne.s32.totalorder %s113, %s116
      %p122 = scmp.eq.s32.totalorder %s16, 0
      %p123 = por %p121, %p122
      %p124 = scmp.ne.s32.totalorder %s113, %s116
      %p125 = scmp.eq.s32.totalorder %s21, 3
      %p126 = por %p124, %p125
      %p127 = scmp.ne.s32.totalorder %s116, %s117
      %p128 = scmp.eq.s32.totalorder %s21, 0
      %p129 = por %p127, %p128
      %p130 = scmp.ne.s32.totalorder %s116, %s117
      %p131 = scmp.eq.s32.totalorder %s22, 3
      %p132 = por %p130, %p131
      %p134 = scmp.ne.s32.totalorder %s117, %s133
      %p135 = scmp.eq.s32.totalorder %s22, 0
      %p136 = por %p134, %p135
      %p137 = scmp.le.s32.totalorder 1, %s16
      %p138 = scmp.lt.s32.totalorder %s16, 5
      %p139 = pnand %p137, %p138
      %p140 = pneg %p139
      // Predicated region
      $region9: #{tpu_custom_call.1} parent=5 // pred_check
        _
      $region10: #{tpu_custom_call.1} parent=5 // pred_check_branch
        %142 = sbr.rel (%p139) target = $region12
      $region11: #{tpu_custom_call.1} parent=5 // pred_region
        %s143 = ssub.s32 %s16, 1
        // Predicated region
        $region13: #{tpu_custom_call.1} parent=11 // pred_check
          %p144 = pneg %p49
        $region14: #{tpu_custom_call.1} parent=11 // pred_check_branch
          %146 = sbr.rel (%p144) target = $region16
        $region15: #{tpu_custom_call.1} parent=11 // pred_region
          %148 = vsyncadd [#allocation3], 0
          %s150 = sshll.u32 %s0, 4
          %s151 = int_to_ptr.hbm [resolvable:$true] %s150
          %s152 = sshll.u32 [#allocation2], 4
          %s153 = int_to_ptr.vmem [resolvable:$true] %s152
          %155 = dma.hbm_to_vmem [thread:$0]  %s151, 512, %s153, [#allocation3]
        $region16: #{tpu_custom_call.1} parent=11 // pred_fallthru
          _
      $region12: #{tpu_custom_call.1} parent=5 // pred_fallthru
        _
      %p156 = scmp.lt.s32.totalorder %s16, 4
      // Predicated region
      $region17: #{tpu_custom_call.1} parent=5 // pred_check
        %p157 = pneg %p156
      $region18: #{tpu_custom_call.1} parent=5 // pred_check_branch
        %159 = sbr.rel (%p157) target = $region20
      $region19: #{tpu_custom_call.1} parent=5 // pred_region
        // Predicated region
        $region21: #{tpu_custom_call.1} parent=19 // pred_check
          %p160 = pneg %p71
        $region22: #{tpu_custom_call.1} parent=19 // pred_check_branch
          %162 = sbr.rel (%p160) target = $region24
        $region23: #{tpu_custom_call.1} parent=19 // pred_region
          %s163 = sand.u32 %s16, 1
          %s164 = scalar_lea.sflag [#allocation6], %s163
          %s165 = sand.u32 %s61, 1
          %s166 = smul.addr %s165, 512
          %s167 = scalar_lea.vmem [#allocation5], %s166
          %s168 = smul.u32 32, %s24
          %s169 = smul.u32 2, %s23
          %171 = vsyncadd %s164, 0
          %s172 = smul.addr %s168, 4
          %s173 = sadd.s32 %s169, %s172
          %s174 = smul.addr %s173, 8
          %s175 = scalar_lea.hbm %s1, %s174
          %s176 = sshll.u32 %s175, 4
          %s177 = int_to_ptr.hbm [resolvable:$true] %s176
          %s178 = sshll.u32 %s167, 4
          %s179 = int_to_ptr.vmem [resolvable:$true] %s178
          %184 = dma.hbm_to_vmem [thread:$0]  %s177, 8192, %s179, %s164, 512, 256, 16
        $region24: #{tpu_custom_call.1} parent=19 // pred_fallthru
          _
        // Predicated region
        $region25: #{tpu_custom_call.1} parent=19 // pred_check
          %p185 = pneg %p97
        $region26: #{tpu_custom_call.1} parent=19 // pred_check_branch
          %187 = sbr.rel (%p185) target = $region28
        $region27: #{tpu_custom_call.1} parent=19 // pred_region
          %s188 = sand.u32 %s16, 1
          %s189 = scalar_lea.sflag [#allocation6], %s188
          %s190 = sand.u32 %s87, 1
          %s191 = smul.addr %s190, 4
          %s192 = scalar_lea.vmem [#allocation7], %s191
          %s193 = smul.u32 2, %s23
          %195 = vsyncadd %s189, 0
          %s196 = smul.addr %s193, 2
          %s197 = scalar_lea.hbm %s2, %s196
          %s199 = sshll.u32 %s197, 4
          %s200 = int_to_ptr.hbm [resolvable:$true] %s199
          %s201 = sshll.u32 %s192, 4
          %s202 = int_to_ptr.vmem [resolvable:$true] %s201
          %204 = dma.hbm_to_vmem [thread:$0]  %s200, 64, %s202, %s189
        $region28: #{tpu_custom_call.1} parent=19 // pred_fallthru
          _
      $region20: #{tpu_custom_call.1} parent=5 // pred_fallthru
        _
      %p205 = scmp.le.s32.totalorder 1, %s16
      %p206 = scmp.lt.s32.totalorder %s16, 5
      %p207 = pnand %p205, %p206
      %p208 = pneg %p207
      // Predicated region
      $region29: #{tpu_custom_call.1} parent=5 // pred_check
        _
      $region30: #{tpu_custom_call.1} parent=5 // pred_check_branch
        %210 = sbr.rel (%p207) target = $region32
      $region31: #{tpu_custom_call.1} parent=5 // pred_region
        %s211 = ssub.s32 %s16, 1
        // Predicated region
        $region33: #{tpu_custom_call.1} parent=31 // pred_check
          %p212 = pneg %p49
        $region34: #{tpu_custom_call.1} parent=31 // pred_check_branch
          %214 = sbr.rel (%p212) target = $region36
        $region35: #{tpu_custom_call.1} parent=31 // pred_region
          %216 = dma.done [#allocation3], 512
        $region36: #{tpu_custom_call.1} parent=31 // pred_fallthru
          _
        %s217 = sand.u32 %s21, 1
        %s218 = scalar_lea.sflag [#allocation6], %s217
        %s219 = sand.u32 %s64, 1
        %s220 = smul.addr %s219, 512
        %s221 = scalar_lea.vmem [#allocation5], %s220
        // Predicated region
        $region37: #{tpu_custom_call.1} parent=31 // pred_check
          %p222 = pneg %p77
        $region38: #{tpu_custom_call.1} parent=31 // pred_check_branch
          %224 = sbr.rel (%p222) target = $region40
        $region39: #{tpu_custom_call.1} parent=31 // pred_region
          %226 = dma.done %s218, 8192
        $region40: #{tpu_custom_call.1} parent=31 // pred_fallthru
          _
        %s227 = sand.u32 %s21, 1
        %s228 = scalar_lea.sflag [#allocation6], %s227
        %s229 = sand.u32 %s90, 1
        %s230 = smul.addr %s229, 4
        %s231 = scalar_lea.vmem [#allocation7], %s230
        // Predicated region
        $region41: #{tpu_custom_call.1} parent=31 // pred_check
          %p232 = pneg %p103
        $region42: #{tpu_custom_call.1} parent=31 // pred_check_branch
          %234 = sbr.rel (%p232) target = $region44
        $region43: #{tpu_custom_call.1} parent=31 // pred_region
          %236 = dma.done %s228, 64
        $region44: #{tpu_custom_call.1} parent=31 // pred_fallthru
          _
        %p237 = pneg %p49
        %p238 = pneg %p46
        %s239 = sand.u32 %s21, 1
        %s240 = scalar_lea.sflag [#allocation6], %s239
        %s241 = sand.u32 %s64, 1
        %s242 = smul.addr %s241, 512
        %s243 = scalar_lea.vmem [#allocation5], %s242
        %p244 = pneg %p77
        %p245 = pneg %p74
        %s246 = sand.u32 %s21, 1
        %s247 = scalar_lea.sflag [#allocation6], %s246
        %s248 = sand.u32 %s90, 1
        %s249 = smul.addr %s248, 4
        %s250 = scalar_lea.vmem [#allocation7], %s249
        %p251 = pneg %p103
        %p252 = pneg %p100
        %p253 = pneg %p129
        %p254 = pneg %p126
        %s255 = sand.u32 %s116, 1
        %s256 = scalar_lea.sflag [#allocation4], %s255
        %s257 = sand.u32 %s116, 1
        %s258 = smul.addr %s257, 16
        %s259 = scalar_lea.vmem [#allocation8], %s258
        %s260 = smul.u32 32, %s26
        %s261 = smul.u32 2, %s25
        %s262 = smul.u32 2, %s25
        %s263 = smul.u32 2, %s25
        %p264 = scmp.eq.s32.totalorder %s26, 0
        // Predicated region
        $region45: #{tpu_custom_call.1} parent=31 // pred_check
          %p265 = pneg %p264
        $region46: #{tpu_custom_call.1} parent=31 // pred_check_branch
          %267 = sbr.rel (%p265) target = $region48
        $region47: #{tpu_custom_call.1} parent=31 // pred_region
          %268 = vst [vmem:[%s259] sm:$0xff] 0.0
          %269 = vst [vmem:[%s259 + $0x8] sm:$0xff] 0.0
        $region48: #{tpu_custom_call.1} parent=31 // pred_fallthru
          _
        %s270 = smul.u32 %s26, 256
        %s271 = sshra.s32 %s270, 7
        %s272 = sand.u32 %s270, 127
        %s273 = smul.addr %s271, 8
        %s274 = scalar_lea.vmem [#allocation2], %s273
        %v275 = vld [vmem:[%s274] sm:$0xff]
        %v276 = vld [vmem:[%s274 + $0x8] sm:$0xff]
        %v277 = vld [vmem:[%s221] sm:$0xff]
        %v278 = vld [vmem:[%s221 + $0x8] sm:$0xff]
        %v279 = vld [vmem:[%s221 + $0x10] sm:$0xff]
        %v280 = vld [vmem:[%s221 + $0x18] sm:$0xff]
        %v281 = vld [vmem:[%s221 + $0x20] sm:$0xff]
        %v282 = vld [vmem:[%s221 + $0x28] sm:$0xff]
        %v283 = vld [vmem:[%s221 + $0x30] sm:$0xff]
        %v284 = vld [vmem:[%s221 + $0x38] sm:$0xff]
        %v285 = vld [vmem:[%s221 + $0x40] sm:$0xff]
        %v286 = vld [vmem:[%s221 + $0x48] sm:$0xff]
        %v287 = vld [vmem:[%s221 + $0x50] sm:$0xff]
        %v288 = vld [vmem:[%s221 + $0x58] sm:$0xff]
        %v289 = vld [vmem:[%s221 + $0x60] sm:$0xff]
        %v290 = vld [vmem:[%s221 + $0x68] sm:$0xff]
        %v291 = vld [vmem:[%s221 + $0x70] sm:$0xff]
        %v292 = vld [vmem:[%s221 + $0x78] sm:$0xff]
        %v293 = vld [vmem:[%s221 + $0x80] sm:$0xff]
        %v294 = vld [vmem:[%s221 + $0x88] sm:$0xff]
        %v295 = vld [vmem:[%s221 + $0x90] sm:$0xff]
        %v296 = vld [vmem:[%s221 + $0x98] sm:$0xff]
        %v297 = vld [vmem:[%s221 + $0xa0] sm:$0xff]
        %v298 = vld [vmem:[%s221 + $0xa8] sm:$0xff]
        %v299 = vld [vmem:[%s221 + $0xb0] sm:$0xff]
        %v300 = vld [vmem:[%s221 + $0xb8] sm:$0xff]
        %v301 = vld [vmem:[%s221 + $0xc0] sm:$0xff]
        %v302 = vld [vmem:[%s221 + $0xc8] sm:$0xff]
        %v303 = vld [vmem:[%s221 + $0xd0] sm:$0xff]
        %v304 = vld [vmem:[%s221 + $0xd8] sm:$0xff]
        %v305 = vld [vmem:[%s221 + $0xe0] sm:$0xff]
        %v306 = vld [vmem:[%s221 + $0xe8] sm:$0xff]
        %v307 = vld [vmem:[%s221 + $0xf0] sm:$0xff]
        %v308 = vld [vmem:[%s221 + $0xf8] sm:$0xff]
        %v309 = vld [vmem:[%s221 + $0x100] sm:$0xff]
        %v310 = vld [vmem:[%s221 + $0x108] sm:$0xff]
        %v311 = vld [vmem:[%s221 + $0x110] sm:$0xff]
        %v312 = vld [vmem:[%s221 + $0x118] sm:$0xff]
        %v313 = vld [vmem:[%s221 + $0x120] sm:$0xff]
        %v314 = vld [vmem:[%s221 + $0x128] sm:$0xff]
        %v315 = vld [vmem:[%s221 + $0x130] sm:$0xff]
        %v316 = vld [vmem:[%s221 + $0x138] sm:$0xff]
        %v317 = vld [vmem:[%s221 + $0x140] sm:$0xff]
        %v318 = vld [vmem:[%s221 + $0x148] sm:$0xff]
        %v319 = vld [vmem:[%s221 + $0x150] sm:$0xff]
        %v320 = vld [vmem:[%s221 + $0x158] sm:$0xff]
        %v321 = vld [vmem:[%s221 + $0x160] sm:$0xff]
        %v322 = vld [vmem:[%s221 + $0x168] sm:$0xff]
        %v323 = vld [vmem:[%s221 + $0x170] sm:$0xff]
        %v324 = vld [vmem:[%s221 + $0x178] sm:$0xff]
        %v325 = vld [vmem:[%s221 + $0x180] sm:$0xff]
        %v326 = vld [vmem:[%s221 + $0x188] sm:$0xff]
        %v327 = vld [vmem:[%s221 + $0x190] sm:$0xff]
        %v328 = vld [vmem:[%s221 + $0x198] sm:$0xff]
        %v329 = vld [vmem:[%s221 + $0x1a0] sm:$0xff]
        %v330 = vld [vmem:[%s221 + $0x1a8] sm:$0xff]
        %v331 = vld [vmem:[%s221 + $0x1b0] sm:$0xff]
        %v332 = vld [vmem:[%s221 + $0x1b8] sm:$0xff]
        %v333 = vld [vmem:[%s221 + $0x1c0] sm:$0xff]
        %v334 = vld [vmem:[%s221 + $0x1c8] sm:$0xff]
        %v335 = vld [vmem:[%s221 + $0x1d0] sm:$0xff]
        %v336 = vld [vmem:[%s221 + $0x1d8] sm:$0xff]
        %v337 = vld [vmem:[%s221 + $0x1e0] sm:$0xff]
        %v338 = vld [vmem:[%s221 + $0x1e8] sm:$0xff]
        %v339 = vld [vmem:[%s221 + $0x1f0] sm:$0xff]
        %v340 = vld [vmem:[%s221 + $0x1f8] sm:$0xff]
        %v341 = vld [vmem:[%s259] sm:$0xff]
        %v342 = vld [vmem:[%s259 + $0x8] sm:$0xff]
        %343 = vmatpush.msra.mxu0 %v307
        %344 = vmatpush.msra.mxu0 %v305
        %345 = vmatpush.msra.mxu0 %v303
        %346 = vmatpush.msra.mxu0 %v301
        %347 = vmatpush.msra.mxu0 %v299
        %348 = vmatpush.msra.mxu0 %v297
        %349 = vmatpush.msra.mxu0 %v295
        %350 = vmatpush.msra.mxu0 %v293
        %351 = vmatpush.msra.mxu0 %v291
        %352 = vmatpush.msra.mxu0 %v289
        %353 = vmatpush.msra.mxu0 %v287
        %354 = vmatpush.msra.mxu0 %v285
        %355 = vmatpush.msra.mxu0 %v283
        %356 = vmatpush.msra.mxu0 %v281
        %357 = vmatpush.msra.mxu0 %v279
        %358 = vmatpush.msra.mxu0 %v277
        %359 = vmatmul.f32.gmra.mxu0 %v275
        %v360 = vpop.f32.mrf.mxu0
        %v361 = vadd.f32 0.0, %v360
        %362 = vdwg.mxu0
        %363 = vmatpush.msra.mxu0 %v339
        %364 = vmatpush.msra.mxu0 %v337
        %365 = vmatpush.msra.mxu0 %v335
        %366 = vmatpush.msra.mxu0 %v333
        %367 = vmatpush.msra.mxu0 %v331
        %368 = vmatpush.msra.mxu0 %v329
        %369 = vmatpush.msra.mxu0 %v327
        %370 = vmatpush.msra.mxu0 %v325
        %371 = vmatpush.msra.mxu0 %v323
        %372 = vmatpush.msra.mxu0 %v321
        %373 = vmatpush.msra.mxu0 %v319
        %374 = vmatpush.msra.mxu0 %v317
        %375 = vmatpush.msra.mxu0 %v315
        %376 = vmatpush.msra.mxu0 %v313
        %377 = vmatpush.msra.mxu0 %v311
        %378 = vmatpush.msra.mxu0 %v309
        %379 = vmatmul.f32.gmra.mxu0 %v276
        %v380 = vpop.f32.mrf.mxu0
        %v381 = vadd.f32 %v361, %v380
        %382 = vdwg.mxu0
        %383 = vmatpush.msra.mxu0 %v308
        %384 = vmatpush.msra.mxu0 %v306
        %385 = vmatpush.msra.mxu0 %v304
        %386 = vmatpush.msra.mxu0 %v302
        %387 = vmatpush.msra.mxu0 %v300
        %388 = vmatpush.msra.mxu0 %v298
        %389 = vmatpush.msra.mxu0 %v296
        %390 = vmatpush.msra.mxu0 %v294
        %391 = vmatpush.msra.mxu0 %v292
        %392 = vmatpush.msra.mxu0 %v290
        %393 = vmatpush.msra.mxu0 %v288
        %394 = vmatpush.msra.mxu0 %v286
        %395 = vmatpush.msra.mxu0 %v284
        %396 = vmatpush.msra.mxu0 %v282
        %397 = vmatpush.msra.mxu0 %v280
        %398 = vmatpush.msra.mxu0 %v278
        %399 = vmatmul.f32.gmra.mxu0 %v275
        %v400 = vpop.f32.mrf.mxu0
        %v401 = vadd.f32 0.0, %v400
        %402 = vdwg.mxu0
        %403 = vmatpush.msra.mxu0 %v340
        %404 = vmatpush.msra.mxu0 %v338
        %405 = vmatpush.msra.mxu0 %v336
        %406 = vmatpush.msra.mxu0 %v334
        %407 = vmatpush.msra.mxu0 %v332
        %408 = vmatpush.msra.mxu0 %v330
        %409 = vmatpush.msra.mxu0 %v328
        %410 = vmatpush.msra.mxu0 %v326
        %411 = vmatpush.msra.mxu0 %v324
        %412 = vmatpush.msra.mxu0 %v322
        %413 = vmatpush.msra.mxu0 %v320
        %414 = vmatpush.msra.mxu0 %v318
        %415 = vmatpush.msra.mxu0 %v316
        %416 = vmatpush.msra.mxu0 %v314
        %417 = vmatpush.msra.mxu0 %v312
        %418 = vmatpush.msra.mxu0 %v310
        %419 = vmatmul.f32.gmra.mxu0 %v276
        %v420 = vpop.f32.mrf.mxu0
        %v421 = vadd.f32 %v401, %v420
        %422 = vdwg.mxu0
        %v423 = vadd.f32 %v341, %v381
        %v424 = vadd.f32 %v342, %v421
        %425 = vst [vmem:[%s259] sm:$0xff] %v423
        %426 = vst [vmem:[%s259 + $0x8] sm:$0xff] %v424
        %p427 = scmp.eq.s32.totalorder %s26, 1
        // Predicated region
        $region49: #{tpu_custom_call.1} parent=31 // pred_check
          %p428 = pneg %p427
        $region50: #{tpu_custom_call.1} parent=31 // pred_check_branch
          %430 = sbr.rel (%p428) target = $region52
        $region51: #{tpu_custom_call.1} parent=31 // pred_region
          %v431 = vld [vmem:[%s259] sm:$0xff]
          %v432 = vld [vmem:[%s259 + $0x8] sm:$0xff]
          %v433 = vrot.slane %v431, 4
          %v434 = vadd.f32 %v431, %v433
          %v435 = vrot.slane %v434, 2
          %v436 = vadd.f32 %v434, %v435
          %v437 = vrot.slane %v436, 1
          %v438 = vadd.f32 %v436, %v437
          %v439 = vrot.slane %v432, 4
          %v440 = vadd.f32 %v432, %v439
          %v441 = vrot.slane %v440, 2
          %v442 = vadd.f32 %v440, %v441
          %v443 = vrot.slane %v442, 1
          %v444 = vadd.f32 %v442, %v443
          %v445 = vmul.f32 %v438, 0.125
          %v446 = vmul.f32 %v444, 0.125
          %v447 = vsub.f32 %v431, %v445
          %v448 = vsub.f32 %v432, %v446
          %v449 = vmul.f32 %v447, %v447
          %v450 = vmul.f32 %v448, %v448
          %v451 = vrot.slane %v449, 4
          %v452 = vadd.f32 %v449, %v451
          %v453 = vrot.slane %v452, 2
          %v454 = vadd.f32 %v452, %v453
          %v455 = vrot.slane %v454, 1
          %v456 = vadd.f32 %v454, %v455
          %v457 = vrot.slane %v450, 4
          %v458 = vadd.f32 %v450, %v457
          %v459 = vrot.slane %v458, 2
          %v460 = vadd.f32 %v458, %v459
          %v461 = vrot.slane %v460, 1
          %v462 = vadd.f32 %v460, %v461
          %v463 = vmul.f32 %v456, 0.125
          %v464 = vmul.f32 %v462, 0.125
          %v465 = vld [vmem:[%s231] ss:$2 sm:$0x3]
          %v466 = vadd.f32 %v463, 1e-05
          %v467 = vadd.f32 %v464, 1e-05
          %v468 = vrsqrt.pop %v466
          %v469 = vmul.f32 %v468, %v466
          %v470 = vmul.f32 %v469, %v468
          %v471 = vmul.f32 0.5, %v470
          %v472 = vsub.f32 1.5, %v471
          %v473 = vmul.f32 %v468, %v472
          %vm474 = vweird.f32 %v466
          %vm475 = vweird.f32 %v468
          %vm476 = vmor %vm474, %vm475
          %v477 = vsel %vm476, %v468, %v473
          %v478 = vrsqrt.pop %v467
          %v479 = vmul.f32 %v478, %v467
          %v480 = vmul.f32 %v479, %v478
          %v481 = vmul.f32 0.5, %v480
          %v482 = vsub.f32 1.5, %v481
          %v483 = vmul.f32 %v478, %v482
          %vm484 = vweird.f32 %v467
          %vm485 = vweird.f32 %v478
          %vm486 = vmor %vm484, %vm485
          %v487 = vsel %vm486, %v478, %v483
          %v490 = vrot.slane %v487, 7
          %vm491 = vcmask 1040384
          %v492 = vsel %vm491, %v477, %v490
          %v494 = vmul.f32 %v465, %v492
          %s495 = scalar_lea.vmem %s231, 1 [#allocation7]
          %v496 = vld [vmem:[%s495] ss:$2 sm:$0x3]
          %v498 = vperm.slane %v494, 0
          %v499 = vperm.slane %v494, 1
          %v502 = vmul.f32 %v445, %v498
          %v503 = vmul.f32 %v446, %v499
          %v506 = vrot.slane %v503, 7
          %v507 = vsel %vm491, %v502, %v506
          %v509 = vsub.f32 %v496, %v507
          %v510 = vmul.f32 %v431, %v498
          %v511 = vmul.f32 %v432, %v499
          %v513 = vperm.slane %v509, 0
          %v514 = vperm.slane %v509, 1
          %v517 = vadd.f32 %v510, %v513
          %v518 = vadd.f32 %v511, %v514
          %519 = vst [vmem:[%s259] sm:$0xff] %v517
          %520 = vst [vmem:[%s259 + $0x8] sm:$0xff] %v518
        $region52: #{tpu_custom_call.1} parent=31 // pred_fallthru
          _
        %s521 = sand.u32 %s116, 1
        %s522 = scalar_lea.sflag [#allocation4], %s521
        %s523 = sand.u32 %s116, 1
        %s524 = smul.addr %s523, 16
        %s525 = scalar_lea.vmem [#allocation8], %s524
        // Predicated region
        $region53: #{tpu_custom_call.1} parent=31 // pred_check
          %p526 = pneg %p126
        $region54: #{tpu_custom_call.1} parent=31 // pred_check_branch
          %528 = sbr.rel (%p526) target = $region56
        $region55: #{tpu_custom_call.1} parent=31 // pred_region
          %s529 = smul.u32 2, %s25
          %531 = vsyncadd %s522, 0
          %s532 = smul.addr %s529, 8
          %s533 = scalar_lea.hbm %s3, %s532
          %s535 = sshll.u32 %s525, 4
          %s536 = int_to_ptr.vmem [resolvable:$true] %s535
          %s537 = sshll.u32 %s533, 4
          %s538 = int_to_ptr.hbm [resolvable:$true] %s537
          %540 = dma.vmem_to_hbm [thread:$0]  %s536, 256, %s538, %s522
        $region56: #{tpu_custom_call.1} parent=31 // pred_fallthru
          _
      $region32: #{tpu_custom_call.1} parent=5 // pred_fallthru
        _
      %p541 = scmp.le.s32.totalorder 2, %s16
      // Predicated region
      $region57: #{tpu_custom_call.1} parent=5 // pred_check
        %p542 = pneg %p541
      $region58: #{tpu_custom_call.1} parent=5 // pred_check_branch
        %544 = sbr.rel (%p542) target = $region60
      $region59: #{tpu_custom_call.1} parent=5 // pred_region
        %s545 = ssub.s32 %s16, 2
        // Predicated region
        $region61: #{tpu_custom_call.1} parent=59 // pred_check
          %p546 = pneg %p132
        $region62: #{tpu_custom_call.1} parent=59 // pred_check_branch
          %548 = sbr.rel (%p546) target = $region64
        $region63: #{tpu_custom_call.1} parent=59 // pred_region
          %s549 = sand.u32 %s117, 1
          %s550 = scalar_lea.sflag [#allocation4], %s549
          %s551 = sand.u32 %s117, 1
          %s552 = smul.addr %s551, 16
          %s553 = scalar_lea.vmem [#allocation8], %s552
          %555 = dma.done %s550, 256
        $region64: #{tpu_custom_call.1} parent=59 // pred_fallthru
          _
      $region60: #{tpu_custom_call.1} parent=5 // pred_fallthru
        _
    $region6: #{tpu_custom_call.1} parent=1 // loop_footer
      %s20 = sadd.s32 1, %s16
    $region7: #{tpu_custom_call.1} parent=1 // loop_footer_branch
      %15 = sbr.rel target = $region3
    $region8: #{tpu_custom_call.1} parent=1 // loop_exit
      _
    %556 = vsyncpa [#allocation3], 1
    %s557 = scalar_lea.sflag [#allocation3], 1
    %558 = vsyncpa %s557, 1
    %559 = vsyncpa [#allocation6], 1
    %s560 = scalar_lea.sflag [#allocation6], 1
    %561 = vsyncpa %s560, 1
    %562 = vsyncpa [#allocation4], 1
    %s563 = scalar_lea.sflag [#allocation4], 1
    %564 = vsyncpa %s563, 1

</llo_original>
